<compile_context>
chip_gen: v6e
topology: v6e:2x2x1
jax: 0.10.0
libtpu: 0.0.40
codegen_flags: <defaults>
</compile_context>

<pallas_src>
import numpy as np
import jax
import jax.numpy as jnp
from jax.experimental import pallas as pl
from jax.experimental.pallas import tpu as pltpu


def _shuffle_kernel(keep_ref, x_ref, o_ref):
    # keep_ref: (R, 1) per-row keep mask in x.dtype (1 = keep, 0 = drop).
    # x_ref / o_ref: (R, L) tile; each row is one (batch, channel) slab.
    o_ref[...] = x_ref[...] * keep_ref[...]


def _vmem_budget():
    """Return (per-block byte target, scoped VMEM limit) for this TPU gen."""
    cap = 128 << 20
    try:
        cap = int(getattr(pltpu.get_tpu_info(), "vmem_capacity_bytes", cap))
    except Exception:
        pass
    if cap <= (64 << 20):            # v7x: 64 MiB VMEM per TensorCore
        return 4 << 20, 24 << 20
    return 6 << 20, 64 << 20         # v5e / v6e: 128 MiB physical VMEM


def random_channel_shuffle(x, *, p=0.5, key=None, training=True):
    """JAX/Pallas equivalent of RandomChannelShuffle.forward (NCHW input)."""
    if not training:
        return x
    if key is None:
        raise ValueError(
            "random_channel_shuffle requires an explicit PRNG key in training "
            "mode (a fixed default would repeat the same mask every call).")

    B, C, H, W = x.shape
    N, L = B * C, H * W
    itemsize = np.dtype(x.dtype).itemsize
    target, vmem_limit = _vmem_budget()
    sub = max(8, 32 // itemsize)     # sublane tile: 8 f32 / 16 bf16 / 32 int8

    # One Bernoulli(p) per (batch, channel), drawn in x.dtype (0/1 are exact),
    # so the kernel never promotes narrow inputs to f32.
    keep = jax.random.bernoulli(key, p, (N, 1)).astype(x.dtype)

    # Lane-dense layout: one row per (batch, channel), H*W along lanes.
    x2 = x.reshape(N, L)

    # If a single row exceeds the block target but H*W is not a 128 multiple,
    # pad lanes up so the lane axis can be tiled in 128-multiples (instead of
    # falling back to a whole-array block that would blow past VMEM).
    L_eff = L
    if L * itemsize > target and L % 128 != 0:
        L_eff = ((L + 127) // 128) * 128
        x2 = jnp.pad(x2, ((0, 0), (0, L_eff - L)))

    # Lane block: full H*W when it fits the target, else ~target in 128 chunks.
    if L_eff * itemsize > target:
        l_blk = min(L_eff, max(128, (target // (itemsize * 128)) * 128))
    else:
        l_blk = L_eff

    # Row block: multiple of the sublane tile, ~target bytes per block.
    rows = max(1, target // max(1, l_blk * itemsize))
    r_blk = max(sub, (rows // sub) * sub)    # clamp to sublane tile, never to N*L
    if r_blk >= N:
        r_blk = N                            # full extent is always legal

    # Guarantee >=2 blocks on the parallel grid when rows allow it, so both
    # v7x TensorCores (each with its own HBM path) get work.
    if r_blk >= N and l_blk >= L_eff and N >= 2 * sub:
        r_blk = max(sub, (((N + 1) // 2) // sub) * sub)

    grid = (pl.cdiv(N, r_blk), pl.cdiv(L_eff, l_blk))

    cost = pl.CostEstimate(
        flops=N * L_eff,
        transcendentals=0,
        bytes_accessed=(2 * N * L_eff + N) * itemsize,
    )

    out2 = pl.pallas_call(
        _shuffle_kernel,
        out_shape=jax.ShapeDtypeStruct((N, L_eff), x.dtype),
        grid_spec=pl.GridSpec(
            grid=grid,
            in_specs=[
                pl.BlockSpec((r_blk, 1), lambda i, j: (i, 0)),       # keep mask
                pl.BlockSpec((r_blk, l_blk), lambda i, j: (i, j)),   # x rows
            ],
            out_specs=pl.BlockSpec((r_blk, l_blk), lambda i, j: (i, j)),
        ),
        compiler_params=pltpu.CompilerParams(
            dimension_semantics=("parallel", "parallel"),
            vmem_limit_bytes=vmem_limit,
        ),
        cost_estimate=cost,
        # TODO(synk): when callers can donate x, switch to
        # input_output_aliases={1: 0} + scalar-prefetched keep in SMEM and only
        # zero-store dropped rows (skip all reads), cutting HBM traffic toward
        # ~(1-p)*N*L write-only.
    )(keep, x2)

    if L_eff != L:
        out2 = out2[:, :L]
    return out2.reshape(B, C, H, W)


if __name__ == "__main__":
    data_key = jax.random.PRNGKey(0)
    B, C, H, W = 2, 4, 16, 16
    x = jax.random.normal(data_key, (B, C, H, W), dtype=jnp.float32)

    p = 0.5
    mask_key = jax.random.PRNGKey(42)

    # Training mode: per-(batch, channel) Bernoulli zero-out.
    y = jax.block_until_ready(
        random_channel_shuffle(x, p=p, key=mask_key, training=True))

    # Reference: identical mask draw + broadcast multiply in plain JAX.
    keep_ref = jax.random.bernoulli(mask_key, p, (B * C, 1)).astype(x.dtype)
    y_ref = x * keep_ref.reshape(B, C, 1, 1)
    np.testing.assert_allclose(np.asarray(y), np.asarray(y_ref), rtol=0, atol=0)

    # Each (b, c) slab must be either all zeros or exactly the input slab.
    xn, yn = np.asarray(x), np.asarray(y)
    for b in range(B):
        for c in range(C):
            slab = yn[b, c]
            assert (np.array_equal(slab, np.zeros_like(slab))
                    or np.array_equal(slab, xn[b, c])), (b, c)

    # bf16 path: mask stays in x.dtype, no f32 promotion inside the kernel.
    xb = x.astype(jnp.bfloat16)
    yb = jax.block_until_ready(
        random_channel_shuffle(xb, p=p, key=mask_key, training=True))
    yb_ref = xb * keep_ref.astype(jnp.bfloat16).reshape(B, C, 1, 1)
    np.testing.assert_array_equal(
        np.asarray(yb).astype(np.float32), np.asarray(yb_ref).astype(np.float32))

    # Eval mode: identity.
    y_eval = jax.block_until_ready(random_channel_shuffle(x, training=False))
    assert np.array_equal(np.asarray(y_eval), xn)

    print("KERNEL_OK")
</pallas_src>

<mosaic_0001>
module attributes {stable_mosaic.version = 11 : i64} {
  func.func @_shuffle_kernel(%arg0: i32, %arg1: i32, %arg2: memref<8x1xf32, #tpu.memory_space<vmem>>, %arg3: memref<8x256xf32, #tpu.memory_space<vmem>>, %arg4: memref<8x256xf32, #tpu.memory_space<vmem>>) attributes {dimension_semantics = [#tpu.dimension_semantics<parallel>, #tpu.dimension_semantics<parallel>], iteration_bounds = array<i64: 1, 1>, scalar_prefetch = 0 : i64, scratch_operands = 0 : i64, tpu.core_type = #tpu.core_type<tc>, window_params = [{transform_indices = @transform_0, window_bounds = array<i64: 8, 1>}, {transform_indices = @transform_1, window_bounds = array<i64: 8, 256>}, {transform_indices = @transform_2, window_bounds = array<i64: 8, 256>}]} {
    %c0 = arith.constant 0 : index
    %c0_0 = arith.constant 0 : index
    %0 = vector.load %arg3[%c0, %c0_0] : memref<8x256xf32, #tpu.memory_space<vmem>>, vector<8x256xf32>
    %c0_1 = arith.constant 0 : index
    %c0_2 = arith.constant 0 : index
    %1 = vector.load %arg2[%c0_1, %c0_2] : memref<8x1xf32, #tpu.memory_space<vmem>>, vector<8x1xf32>
    %2 = vector.broadcast %1 : vector<8x1xf32> to vector<8x256xf32>
    %3 = arith.mulf %0, %2 : vector<8x256xf32>
    %c0_3 = arith.constant 0 : index
    %c0_4 = arith.constant 0 : index
    %4 = vector.load %arg4[%c0_3, %c0_4] : memref<8x256xf32, #tpu.memory_space<vmem>>, vector<8x256xf32>
    tpu.vector_store %arg4[%c0_3, %c0_4], %3 {strides = array<i32>} : memref<8x256xf32, #tpu.memory_space<vmem>>, vector<8x256xf32>,
    return
  }
  func.func @transform_0(%arg0: i32, %arg1: i32) -> (i32, i32) {
    %c0_i32 = arith.constant 0 : i32
    %c0_i32_0 = arith.constant 0 : i32
    return %arg0, %c0_i32 : i32, i32
  }
  func.func @transform_1(%arg0: i32, %arg1: i32) -> (i32, i32) {
    %c0_i32 = arith.constant 0 : i32
    return %arg0, %arg1 : i32, i32
  }
  func.func @transform_2(%arg0: i32, %arg1: i32) -> (i32, i32) {
    %c0_i32 = arith.constant 0 : i32
    return %arg0, %arg1 : i32, i32
  }
}

</mosaic_0001>

<llo_original>
// kernel: tpu_custom_call.1
$region0: #{tpu_custom_call.1}
  #allocation0 [shape = 'u32[]', space=smem, size = 0x4, offset = 0x4, fixed_abs, tag = 'smem constant byte address 0x4 - core index']
  #allocation1 [shape = 'u32[144,128]{1,0:T(1,128)}', space=vmem, size = 0x12000, scoped, tag = 'internal scratch']
  %s0 = inlined_call_operand.vmem [shape: f32[8,1], index: 0, kind: input, shape index: {}]
  %s1 = inlined_call_operand.hbm [shape: f32[8,256], index: 1, kind: input, shape index: {}]
  %s2 = inlined_call_operand.hbm [shape: f32[8,256], index: 2, kind: output, shape index: {}]
  %s3 = sld [smem:[#allocation0]]
  $region22: #{tpu_custom_call.1} parent=0
    _
  %s5 = ssub.s32 1, %s3
  %s6 = scalar_select 0, %s5, %s3
  $region1: #{tpu_custom_call.1} parent=0
    #allocation2 [shape = 'u8[8192]{0}', space=vmem, size = 0x2000, scoped, tag = 'input window, operand 1, single buffered']
    #allocation3 [shape = 's32[1]{0}', space=sflag, size = 0x4, scoped, tag = 'scoped memory for tpu_custom_call.1']
    #allocation4 [shape = 's32[1]{0}', space=sflag, size = 0x4, scoped, tag = 'scoped memory for tpu_custom_call.1']
    #allocation5 [shape = 'u8[8192]{0}', space=vmem, size = 0x2000, scoped, tag = 'output window, operand 0, single buffered']
    %7 = vsyncpa [#allocation3], 0
    %8 = vsyncpa [#allocation4], 0
    // Predicated region
    $region2: #{tpu_custom_call.1} parent=1 // pred_check
      _
    $region3: #{tpu_custom_call.1} parent=1 // pred_check_branch
      %10 = sbr.rel (0) target = $region5
    $region4: #{tpu_custom_call.1} parent=1 // pred_region
      _
    $region5: #{tpu_custom_call.1} parent=1 // pred_fallthru
      _
    // Predicated region
    $region6: #{tpu_custom_call.1} parent=1 // pred_check
      _
    $region7: #{tpu_custom_call.1} parent=1 // pred_check_branch
      %12 = sbr.rel (0) target = $region9
    $region8: #{tpu_custom_call.1} parent=1 // pred_region
      %s14 = ssub.s32 256, 256
      %15 = vsyncadd [#allocation3], %s14
      %s17 = sshll.u32 [#allocation2], 4
      %s18 = int_to_ptr.vmem [resolvable:$true] %s17
      %20 = dma.hbm_to_vmem [thread:$0]  %s1, 256, %s18, [#allocation3]
    $region9: #{tpu_custom_call.1} parent=1 // pred_fallthru
      _
    // Predicated region
    $region10: #{tpu_custom_call.1} parent=1 // pred_check
      _
    $region11: #{tpu_custom_call.1} parent=1 // pred_check_branch
      %22 = sbr.rel (0) target = $region13
    $region12: #{tpu_custom_call.1} parent=1 // pred_region
      %23 = dma.done [#allocation3], 256
    $region13: #{tpu_custom_call.1} parent=1 // pred_fallthru
      _
    %v24 = vld [vmem:[#allocation2] sm:$0xff]
    %v25 = vld [vmem:[#allocation2 + $0x8] sm:$0xff]
    %v26 = vld [vmem:[%s0] sm:$0xff]
    %28 = vset.pattern.permute.xlu0 0
    %29 = vperm.xlu0 %28, %v26
    %v30 = vpop.permute.xlu0 %29
    %v32 = vmul.f32 %v24, %v30
    %v33 = vmul.f32 %v25, %v30
    %34 = vst [vmem:[#allocation5] sm:$0xff] %v32
    %35 = vst [vmem:[#allocation5 + $0x8] sm:$0xff] %v33
    // Predicated region
    $region14: #{tpu_custom_call.1} parent=1 // pred_check
      _
    $region15: #{tpu_custom_call.1} parent=1 // pred_check_branch
      %37 = sbr.rel (0) target = $region17
    $region16: #{tpu_custom_call.1} parent=1 // pred_region
      %s39 = ssub.s32 256, 256
      %40 = vsyncadd [#allocation4], %s39
      %s42 = sshll.u32 [#allocation5], 4
      %s43 = int_to_ptr.vmem [resolvable:$true] %s42
      %45 = dma.vmem_to_hbm [thread:$0]  %s43, 256, %s2, [#allocation4]
    $region17: #{tpu_custom_call.1} parent=1 // pred_fallthru
      _
    // Predicated region
    $region18: #{tpu_custom_call.1} parent=1 // pred_check
      _
    $region19: #{tpu_custom_call.1} parent=1 // pred_check_branch
      %47 = sbr.rel (0) target = $region21
    $region20: #{tpu_custom_call.1} parent=1 // pred_region
      %48 = dma.done [#allocation4], 256
    $region21: #{tpu_custom_call.1} parent=1 // pred_fallthru
      _
    %49 = vsyncpa [#allocation3], 1
    %50 = vsyncpa [#allocation4], 1

</llo_original>
